<compile_context>
chip_gen: v7x
topology: tpu7x:2x2x1
jax: 0.10.0
libtpu: 0.0.40
codegen_flags: <defaults>
</compile_context>

<pallas_src>
import functools
import math

import jax
import jax.numpy as jnp
from jax.experimental import pallas as pl
from jax.experimental.pallas import tpu as pltpu

_TWO_PI = 6.283185307179586
_VAR_FLOOR = 1e-6
_EPS = 1e-12


def _pdfam_gmm_kernel(x_ref, p_ref, o_ref, *, num_K, num_T):
    """One grid step: a tile of rows, each row = h*w spatial samples of one (b,c).

    x_ref : (TR, N)   spatial samples per row (native dtype, N = h*w, full extent)
    p_ref : (P,  3)   packed per-row params [width^2, coef, eps+1] (f32), whole-resident
    o_ref : (TR, N)   gated output (native dtype)
    """
    x = x_ref[...].astype(jnp.float32)              # (TR, N)
    tr, n = x.shape
    inv_n = 1.0 / float(n)

    # per-row params: slice the resident (P, 3) buffer for this tile of rows
    i = pl.program_id(0)
    r0 = pl.multiple_of(i * tr, tr)
    p = p_ref[pl.ds(r0, tr), :].astype(jnp.float32)  # (TR, 3)
    w2 = p[:, 0:1]                                   # softplus(width)^2
    coef = p[:, 1:2]                                 # softplus(coef)
    eps1 = p[:, 2:3]                                 # softplus(eps) + 1

    x2 = x * x                                       # hoisted once, reused everywhere

    # --- loop-invariant totals + deterministic GMM init (per row) ------------
    S1 = jnp.sum(x, axis=-1, keepdims=True)          # (TR,1)
    S2 = jnp.sum(x2, axis=-1, keepdims=True)         # (TR,1)
    mean = S1 * inv_n
    ex2 = S2 * inv_n
    var = jnp.maximum(ex2 - mean * mean, 0.0) + _VAR_FLOOR
    std = jnp.sqrt(var)

    lp0 = math.log(1.0 / num_K)
    mus, vars_, pis, log_pis = [], [], [], []
    for k in range(num_K):
        off = (2.0 * (k + 0.5) / num_K) - 1.0        # evenly spread in (-1, 1)
        mus.append(mean + off * std)
        vars_.append(var)
        pis.append(1.0 / num_K)                      # python float, no broadcast
        log_pis.append(lp0)

    # --- EM iterations (num_T static -> fully unrolled) ----------------------
    for _ in range(num_T):
        if num_K == 2:
            inv_v0 = pl.reciprocal(vars_[0])         # (TR,1)
            inv_v1 = pl.reciprocal(vars_[1])
            nh0 = -0.5 * inv_v0
            nh1 = -0.5 * inv_v1
            c_row = (log_pis[1] - log_pis[0]) - 0.5 * (jnp.log(vars_[1]) -
                                                       jnp.log(vars_[0]))
            # quadratic-form logit difference: d = A*x2 + B*x + C  (per-row coeffs)
            A = nh1 - nh0
            B = -2.0 * (nh1 * mus[1] - nh0 * mus[0])
            C = nh1 * mus[1] * mus[1] - nh0 * mus[0] * mus[0] + c_row
            d = A * x2 + B * x + C                   # (TR, N)
            r1 = 0.5 * jnp.tanh(0.5 * d) + 0.5       # sigmoid via EUP tanh
            # only k=1 statistics are reduced; k=0 derived from totals
            s1 = jnp.sum(r1, axis=-1, keepdims=True)
            sx1 = jnp.sum(r1 * x, axis=-1, keepdims=True)
            sq1 = jnp.sum(r1 * x2, axis=-1, keepdims=True)
            Nks = [float(n) - s1 + _EPS, s1 + _EPS]
            Sxs = [S1 - sx1, sx1]
            Sqs = [S2 - sq1, sq1]
        else:
            # general K: max-shifted softmax (quadratic form per component)
            inv_vs = [pl.reciprocal(vars_[k]) for k in range(num_K)]
            nhs = [-0.5 * inv_vs[k] for k in range(num_K)]
            logits = [
                log_pis[k] - 0.5 * jnp.log(vars_[k])
                + (nhs[k] * x2 + (-2.0 * nhs[k] * mus[k]) * x
                   + nhs[k] * mus[k] * mus[k])
                for k in range(num_K)
            ]
            m = logits[0]
            for k in range(1, num_K):
                m = jnp.maximum(m, logits[k])
            gk = [jnp.exp(logits[k] - m) for k in range(num_K)]
            tot = gk[0]
            for k in range(1, num_K):
                tot = tot + gk[k]
            inv_tot = pl.reciprocal(tot + _EPS, approx=True)   # tot >= 1
            rs = [gk[k] * inv_tot for k in range(num_K)]
            Nks = [jnp.sum(rs[k], axis=-1, keepdims=True) + _EPS
                   for k in range(num_K)]
            Sxs = [jnp.sum(rs[k] * x, axis=-1, keepdims=True)
                   for k in range(num_K)]
            Sqs = [jnp.sum(rs[k] * x2, axis=-1, keepdims=True)
                   for k in range(num_K)]

        new_mus, new_vars, new_pis, new_log_pis = [], [], [], []
        for k in range(num_K):
            inv_Nk = pl.reciprocal(Nks[k])
            mu_k = Sxs[k] * inv_Nk
            var_k = jnp.maximum(Sqs[k] * inv_Nk - mu_k * mu_k, 0.0) + _VAR_FLOOR
            pi_k = Nks[k] * inv_n
            new_mus.append(mu_k)
            new_vars.append(var_k)
            new_pis.append(pi_k)
            new_log_pis.append(jnp.log(pi_k))
        mus, vars_, pis, log_pis = new_mus, new_vars, new_pis, new_log_pis

    # --- evaluate pdf with learnable per-channel width scaling ---------------
    pdf = None
    for k in range(num_K):
        v_eff = vars_[k] * w2 + _VAR_FLOOR                       # (TR,1)
        nh_eff = -0.5 * pl.reciprocal(v_eff)
        pref = pis[k] * jax.lax.rsqrt(_TWO_PI * v_eff)           # (TR,1)
        a = nh_eff
        bq = -2.0 * nh_eff * mus[k]
        cq = nh_eff * mus[k] * mus[k]
        term = pref * jnp.exp(a * x2 + bq * x + cq)
        pdf = term if pdf is None else pdf + term

    # --- final gating:  x * 1 / (eps + pdf * coef + 1)  (exact reciprocal) ----
    gate = pl.reciprocal(eps1 + pdf * coef)
    o_ref[...] = (x * gate).astype(o_ref.dtype)


def pdfam_gmm_forward(x, learn_eps, learn_coef, learn_width,
                      num_T=3, num_K=2, row_tile=None):
    """Functional forward of pdfam_gmm_module.

    x           : (b, c, h, w)  NCHW, like the PyTorch module
    learn_eps   : (1, c, 1, 1)
    learn_coef  : (1, c, 1, 1)
    learn_width : (1, c, 1, 1)
    """
    b, c, h, w = x.shape
    n = h * w
    rows = b * c

    X = x.reshape(rows, n)                           # free view, native dtype

    # softplus on the tiny per-channel params is glue; pack into one (rows,3) array
    sp = jax.nn.softplus
    w_sp = sp(learn_width.astype(jnp.float32)).reshape(c)
    e_sp = sp(learn_eps.astype(jnp.float32)).reshape(c)
    c_sp = sp(learn_coef.astype(jnp.float32)).reshape(c)
    params_c = jnp.stack([w_sp * w_sp, c_sp, e_sp + 1.0], axis=-1)   # (c, 3)
    params = jnp.broadcast_to(params_c[None], (b, c, 3)).reshape(rows, 3)

    sub = 8 if X.dtype == jnp.float32 else 16
    itemsize = jnp.dtype(X.dtype).itemsize

    # generation-aware VMEM budget (128 MiB on v5e/v6e, 64 MiB on v7x)
    try:
        vmem_cap = int(pltpu.get_tpu_info().vmem_capacity_bytes)
    except Exception:
        vmem_cap = 64 * 1024 * 1024                  # conservative: v7x
    if vmem_cap >= 100 * 1024 * 1024:                # v5e / v6e
        budget = 48 * 1024 * 1024
        vmem_limit = 96 * 1024 * 1024
    else:                                            # v7x
        budget = 20 * 1024 * 1024
        vmem_limit = 48 * 1024 * 1024

    # K-aware live-array estimate per row: f32 intermediates + double-buffered I/O
    live_f32 = 12 if num_K <= 2 else (8 + 3 * num_K)
    per_row = n * 4 * live_f32 + n * itemsize * 4

    if row_tile is None:
        row_tile = max(sub, (budget // per_row) // sub * sub)
    row_tile = int(row_tile)

    if row_tile >= rows:
        # guarantee >=2 grid steps when rows allow it (dual TC on v7x; ~free elsewhere)
        half = -(-rows // 2)
        half = -(-half // sub) * sub
        if rows >= 2 * sub and half < rows:
            row_tile = half
        else:
            row_tile = rows                          # single full-extent row block
    else:
        row_tile = max(sub, (row_tile // sub) * sub)

    num_steps = -(-rows // row_tile)

    # params stays whole-resident in VMEM; pad its rows (tiny) so the in-kernel
    # pl.ds slice of the last (possibly partial) row block never goes OOB.
    pad_rows = num_steps * row_tile - rows
    if pad_rows:
        params = jnp.pad(params, ((0, pad_rows), (0, 0)), constant_values=1.0)
    p_rows = num_steps * row_tile

    kernel = functools.partial(_pdfam_gmm_kernel, num_K=int(num_K), num_T=int(num_T))

    out = pl.pallas_call(
        kernel,
        out_shape=jax.ShapeDtypeStruct((rows, n), X.dtype),
        grid=(num_steps,),
        in_specs=[
            # last dim = full extent (legal for any h*w); partial last row block OK
            pl.BlockSpec((row_tile, n), lambda i: (i, 0)),
            # whole-resident params: block index constant -> fetched once
            pl.BlockSpec((p_rows, 3), lambda i: (0, 0)),
        ],
        out_specs=pl.BlockSpec((row_tile, n), lambda i: (i, 0)),
        compiler_params=pltpu.CompilerParams(
            dimension_semantics=("parallel",),
            vmem_limit_bytes=vmem_limit,
        ),
    )(X, params)

    return out.reshape(b, c, h, w)


if __name__ == "__main__":
    key = jax.random.PRNGKey(0)
    b, c, h, w = 2, 4, 16, 16

    x = jax.random.normal(key, (b, c, h, w), dtype=jnp.float32)

    # deterministic parameter init, exactly as the module's __init__:
    learn_eps = jnp.zeros((1, c, 1, 1), jnp.float32)   # nn.Parameter(torch.zeros)
    learn_coef = jnp.ones((1, c, 1, 1), jnp.float32)   # nn.Parameter(torch.ones)
    learn_width = jnp.ones((1, c, 1, 1), jnp.float32)  # nn.Parameter(torch.ones)

    out = pdfam_gmm_forward(x, learn_eps, learn_coef, learn_width, num_T=3, num_K=2)
    out = jax.block_until_ready(out)

    assert out.shape == x.shape and out.dtype == x.dtype
    assert bool(jnp.all(jnp.isfinite(out)))
    print("KERNEL_OK")
</pallas_src>

<mosaic_0001>
module attributes {stable_mosaic.version = 11 : i64} {
  func.func @_pdfam_gmm_kernel(%arg0: i32, %arg1: memref<8x256xf32, #tpu.memory_space<vmem>>, %arg2: memref<8x3xf32, #tpu.memory_space<vmem>>, %arg3: memref<8x256xf32, #tpu.memory_space<vmem>>) attributes {dimension_semantics = [#tpu.dimension_semantics<parallel>], iteration_bounds = array<i64: 1>, scalar_prefetch = 0 : i64, scratch_operands = 0 : i64, tpu.core_type = #tpu.core_type<tc>, window_params = [{transform_indices = @transform_0, window_bounds = array<i64: 8, 256>}, {pipeline_mode = #tpu.pipeline_mode<synchronous>, transform_indices = @transform_1, window_bounds = array<i64: 8, 3>}, {transform_indices = @transform_2, window_bounds = array<i64: 8, 256>}]} {
    %c0 = arith.constant 0 : index
    %c0_0 = arith.constant 0 : index
    %0 = vector.load %arg1[%c0, %c0_0] : memref<8x256xf32, #tpu.memory_space<vmem>>, vector<8x256xf32>
    %c8_i32 = arith.constant 8 : i32
    %1 = arith.muli %arg0, %c8_i32 : i32
    %2 = tpu.assume_multiple %1, 8 : i32
    %3 = arith.index_cast %2 : i32 to index
    %c0_1 = arith.constant 0 : index
    %4 = vector.load %arg2[%3, %c0_1] : memref<8x3xf32, #tpu.memory_space<vmem>>, vector<8x3xf32>
    %5 = vector.extract_strided_slice %4 {offsets = [0, 0], sizes = [8, 1], strides = [1, 1]} : vector<8x3xf32> to vector<8x1xf32>
    %6 = vector.extract_strided_slice %4 {offsets = [0, 1], sizes = [8, 1], strides = [1, 1]} : vector<8x3xf32> to vector<8x1xf32>
    %7 = vector.extract_strided_slice %4 {offsets = [0, 2], sizes = [8, 1], strides = [1, 1]} : vector<8x3xf32> to vector<8x1xf32>
    %8 = arith.mulf %0, %0 : vector<8x256xf32>
    %cst = arith.constant dense<0.000000e+00> : vector<8xf32>
    %9 = vector.multi_reduction <add>, %0, %cst [1] : vector<8x256xf32> to vector<8xf32>
    %10 = vector.shape_cast %9 : vector<8xf32> to vector<8x1xf32>
    %cst_2 = arith.constant dense<0.000000e+00> : vector<8xf32>
    %11 = vector.multi_reduction <add>, %8, %cst_2 [1] : vector<8x256xf32> to vector<8xf32>
    %12 = vector.shape_cast %11 : vector<8xf32> to vector<8x1xf32>
    %cst_3 = arith.constant 3.906250e-03 : f32
    %13 = vector.broadcast %cst_3 : f32 to vector<8x1xf32>
    %14 = arith.mulf %10, %13 : vector<8x1xf32>
    %cst_4 = arith.constant 3.906250e-03 : f32
    %15 = vector.broadcast %cst_4 : f32 to vector<8x1xf32>
    %16 = arith.mulf %12, %15 : vector<8x1xf32>
    %17 = arith.mulf %14, %14 : vector<8x1xf32>
    %18 = arith.subf %16, %17 : vector<8x1xf32>
    %cst_5 = arith.constant 0.000000e+00 : f32
    %19 = vector.broadcast %cst_5 : f32 to vector<8x1xf32>
    %20 = arith.maximumf %18, %19 : vector<8x1xf32>
    %cst_6 = arith.constant 9.99999997E-7 : f32
    %21 = vector.broadcast %cst_6 : f32 to vector<8x1xf32>
    %22 = arith.addf %20, %21 : vector<8x1xf32>
    %23 = math.sqrt %22 : vector<8x1xf32>
    %cst_7 = arith.constant -5.000000e-01 : f32
    %24 = vector.broadcast %cst_7 : f32 to vector<8x1xf32>
    %25 = arith.mulf %24, %23 : vector<8x1xf32>
    %26 = arith.addf %14, %25 : vector<8x1xf32>
    %cst_8 = arith.constant 5.000000e-01 : f32
    %27 = vector.broadcast %cst_8 : f32 to vector<8x1xf32>
    %28 = arith.mulf %27, %23 : vector<8x1xf32>
    %29 = arith.addf %14, %28 : vector<8x1xf32>
    %30 = tpu.reciprocal %22 : vector<8x1xf32> -> vector<8x1xf32>
    %31 = tpu.reciprocal %22 : vector<8x1xf32> -> vector<8x1xf32>
    %cst_9 = arith.constant -5.000000e-01 : f32
    %32 = vector.broadcast %cst_9 : f32 to vector<8x1xf32>
    %33 = arith.mulf %32, %30 : vector<8x1xf32>
    %cst_10 = arith.constant -5.000000e-01 : f32
    %34 = vector.broadcast %cst_10 : f32 to vector<8x1xf32>
    %35 = arith.mulf %34, %31 : vector<8x1xf32>
    %36 = math.log %22 : vector<8x1xf32>
    %37 = math.log %22 : vector<8x1xf32>
    %38 = arith.subf %36, %37 : vector<8x1xf32>
    %cst_11 = arith.constant 5.000000e-01 : f32
    %39 = vector.broadcast %cst_11 : f32 to vector<8x1xf32>
    %40 = arith.mulf %39, %38 : vector<8x1xf32>
    %cst_12 = arith.constant 0.000000e+00 : f32
    %41 = vector.broadcast %cst_12 : f32 to vector<8x1xf32>
    %42 = arith.subf %41, %40 : vector<8x1xf32>
    %43 = arith.subf %35, %33 : vector<8x1xf32>
    %44 = arith.mulf %35, %29 : vector<8x1xf32>
    %45 = arith.mulf %33, %26 : vector<8x1xf32>
    %46 = arith.subf %44, %45 : vector<8x1xf32>
    %cst_13 = arith.constant -2.000000e+00 : f32
    %47 = vector.broadcast %cst_13 : f32 to vector<8x1xf32>
    %48 = arith.mulf %47, %46 : vector<8x1xf32>
    %49 = arith.mulf %35, %29 : vector<8x1xf32>
    %50 = arith.mulf %49, %29 : vector<8x1xf32>
    %51 = arith.mulf %33, %26 : vector<8x1xf32>
    %52 = arith.mulf %51, %26 : vector<8x1xf32>
    %53 = arith.subf %50, %52 : vector<8x1xf32>
    %54 = arith.addf %53, %42 : vector<8x1xf32>
    %55 = vector.broadcast %43 : vector<8x1xf32> to vector<8x256xf32>
    %56 = arith.mulf %55, %8 : vector<8x256xf32>
    %57 = vector.broadcast %48 : vector<8x1xf32> to vector<8x256xf32>
    %58 = arith.mulf %57, %0 : vector<8x256xf32>
    %59 = arith.addf %56, %58 : vector<8x256xf32>
    %60 = vector.broadcast %54 : vector<8x1xf32> to vector<8x256xf32>
    %61 = arith.addf %59, %60 : vector<8x256xf32>
    %cst_14 = arith.constant 5.000000e-01 : f32
    %62 = vector.broadcast %cst_14 : f32 to vector<8x256xf32>
    %63 = arith.mulf %62, %61 : vector<8x256xf32>
    %64 = math.tanh %63 : vector<8x256xf32>
    %cst_15 = arith.constant 5.000000e-01 : f32
    %65 = vector.broadcast %cst_15 : f32 to vector<8x256xf32>
    %66 = arith.mulf %65, %64 : vector<8x256xf32>
    %cst_16 = arith.constant 5.000000e-01 : f32
    %67 = vector.broadcast %cst_16 : f32 to vector<8x256xf32>
    %68 = arith.addf %66, %67 : vector<8x256xf32>
    %cst_17 = arith.constant dense<0.000000e+00> : vector<8xf32>
    %69 = vector.multi_reduction <add>, %68, %cst_17 [1] : vector<8x256xf32> to vector<8xf32>
    %70 = vector.shape_cast %69 : vector<8xf32> to vector<8x1xf32>
    %71 = arith.mulf %68, %0 : vector<8x256xf32>
    %cst_18 = arith.constant dense<0.000000e+00> : vector<8xf32>
    %72 = vector.multi_reduction <add>, %71, %cst_18 [1] : vector<8x256xf32> to vector<8xf32>
    %73 = vector.shape_cast %72 : vector<8xf32> to vector<8x1xf32>
    %74 = arith.mulf %68, %8 : vector<8x256xf32>
    %cst_19 = arith.constant dense<0.000000e+00> : vector<8xf32>
    %75 = vector.multi_reduction <add>, %74, %cst_19 [1] : vector<8x256xf32> to vector<8xf32>
    %76 = vector.shape_cast %75 : vector<8xf32> to vector<8x1xf32>
    %cst_20 = arith.constant 2.560000e+02 : f32
    %77 = vector.broadcast %cst_20 : f32 to vector<8x1xf32>
    %78 = arith.subf %77, %70 : vector<8x1xf32>
    %cst_21 = arith.constant 9.99999996E-13 : f32
    %79 = vector.broadcast %cst_21 : f32 to vector<8x1xf32>
    %80 = arith.addf %78, %79 : vector<8x1xf32>
    %cst_22 = arith.constant 9.99999996E-13 : f32
    %81 = vector.broadcast %cst_22 : f32 to vector<8x1xf32>
    %82 = arith.addf %70, %81 : vector<8x1xf32>
    %83 = arith.subf %10, %73 : vector<8x1xf32>
    %84 = arith.subf %12, %76 : vector<8x1xf32>
    %85 = tpu.reciprocal %80 : vector<8x1xf32> -> vector<8x1xf32>
    %86 = arith.mulf %83, %85 : vector<8x1xf32>
    %87 = arith.mulf %84, %85 : vector<8x1xf32>
    %88 = arith.mulf %86, %86 : vector<8x1xf32>
    %89 = arith.subf %87, %88 : vector<8x1xf32>
    %cst_23 = arith.constant 0.000000e+00 : f32
    %90 = vector.broadcast %cst_23 : f32 to vector<8x1xf32>
    %91 = arith.maximumf %89, %90 : vector<8x1xf32>
    %cst_24 = arith.constant 9.99999997E-7 : f32
    %92 = vector.broadcast %cst_24 : f32 to vector<8x1xf32>
    %93 = arith.addf %91, %92 : vector<8x1xf32>
    %cst_25 = arith.constant 3.906250e-03 : f32
    %94 = vector.broadcast %cst_25 : f32 to vector<8x1xf32>
    %95 = arith.mulf %80, %94 : vector<8x1xf32>
    %96 = math.log %95 : vector<8x1xf32>
    %97 = tpu.reciprocal %82 : vector<8x1xf32> -> vector<8x1xf32>
    %98 = arith.mulf %73, %97 : vector<8x1xf32>
    %99 = arith.mulf %76, %97 : vector<8x1xf32>
    %100 = arith.mulf %98, %98 : vector<8x1xf32>
    %101 = arith.subf %99, %100 : vector<8x1xf32>
    %cst_26 = arith.constant 0.000000e+00 : f32
    %102 = vector.broadcast %cst_26 : f32 to vector<8x1xf32>
    %103 = arith.maximumf %101, %102 : vector<8x1xf32>
    %cst_27 = arith.constant 9.99999997E-7 : f32
    %104 = vector.broadcast %cst_27 : f32 to vector<8x1xf32>
    %105 = arith.addf %103, %104 : vector<8x1xf32>
    %cst_28 = arith.constant 3.906250e-03 : f32
    %106 = vector.broadcast %cst_28 : f32 to vector<8x1xf32>
    %107 = arith.mulf %82, %106 : vector<8x1xf32>
    %108 = math.log %107 : vector<8x1xf32>
    %109 = tpu.reciprocal %93 : vector<8x1xf32> -> vector<8x1xf32>
    %110 = tpu.reciprocal %105 : vector<8x1xf32> -> vector<8x1xf32>
    %cst_29 = arith.constant -5.000000e-01 : f32
    %111 = vector.broadcast %cst_29 : f32 to vector<8x1xf32>
    %112 = arith.mulf %111, %109 : vector<8x1xf32>
    %cst_30 = arith.constant -5.000000e-01 : f32
    %113 = vector.broadcast %cst_30 : f32 to vector<8x1xf32>
    %114 = arith.mulf %113, %110 : vector<8x1xf32>
    %115 = arith.subf %108, %96 : vector<8x1xf32>
    %116 = math.log %105 : vector<8x1xf32>
    %117 = math.log %93 : vector<8x1xf32>
    %118 = arith.subf %116, %117 : vector<8x1xf32>
    %cst_31 = arith.constant 5.000000e-01 : f32
    %119 = vector.broadcast %cst_31 : f32 to vector<8x1xf32>
    %120 = arith.mulf %119, %118 : vector<8x1xf32>
    %121 = arith.subf %115, %120 : vector<8x1xf32>
    %122 = arith.subf %114, %112 : vector<8x1xf32>
    %123 = arith.mulf %114, %98 : vector<8x1xf32>
    %124 = arith.mulf %112, %86 : vector<8x1xf32>
    %125 = arith.subf %123, %124 : vector<8x1xf32>
    %cst_32 = arith.constant -2.000000e+00 : f32
    %126 = vector.broadcast %cst_32 : f32 to vector<8x1xf32>
    %127 = arith.mulf %126, %125 : vector<8x1xf32>
    %128 = arith.mulf %114, %98 : vector<8x1xf32>
    %129 = arith.mulf %128, %98 : vector<8x1xf32>
    %130 = arith.mulf %112, %86 : vector<8x1xf32>
    %131 = arith.mulf %130, %86 : vector<8x1xf32>
    %132 = arith.subf %129, %131 : vector<8x1xf32>
    %133 = arith.addf %132, %121 : vector<8x1xf32>
    %134 = vector.broadcast %122 : vector<8x1xf32> to vector<8x256xf32>
    %135 = arith.mulf %134, %8 : vector<8x256xf32>
    %136 = vector.broadcast %127 : vector<8x1xf32> to vector<8x256xf32>
    %137 = arith.mulf %136, %0 : vector<8x256xf32>
    %138 = arith.addf %135, %137 : vector<8x256xf32>
    %139 = vector.broadcast %133 : vector<8x1xf32> to vector<8x256xf32>
    %140 = arith.addf %138, %139 : vector<8x256xf32>
    %cst_33 = arith.constant 5.000000e-01 : f32
    %141 = vector.broadcast %cst_33 : f32 to vector<8x256xf32>
    %142 = arith.mulf %141, %140 : vector<8x256xf32>
    %143 = math.tanh %142 : vector<8x256xf32>
    %cst_34 = arith.constant 5.000000e-01 : f32
    %144 = vector.broadcast %cst_34 : f32 to vector<8x256xf32>
    %145 = arith.mulf %144, %143 : vector<8x256xf32>
    %cst_35 = arith.constant 5.000000e-01 : f32
    %146 = vector.broadcast %cst_35 : f32 to vector<8x256xf32>
    %147 = arith.addf %145, %146 : vector<8x256xf32>
    %cst_36 = arith.constant dense<0.000000e+00> : vector<8xf32>
    %148 = vector.multi_reduction <add>, %147, %cst_36 [1] : vector<8x256xf32> to vector<8xf32>
    %149 = vector.shape_cast %148 : vector<8xf32> to vector<8x1xf32>
    %150 = arith.mulf %147, %0 : vector<8x256xf32>
    %cst_37 = arith.constant dense<0.000000e+00> : vector<8xf32>
    %151 = vector.multi_reduction <add>, %150, %cst_37 [1] : vector<8x256xf32> to vector<8xf32>
    %152 = vector.shape_cast %151 : vector<8xf32> to vector<8x1xf32>
    %153 = arith.mulf %147, %8 : vector<8x256xf32>
    %cst_38 = arith.constant dense<0.000000e+00> : vector<8xf32>
    %154 = vector.multi_reduction <add>, %153, %cst_38 [1] : vector<8x256xf32> to vector<8xf32>
    %155 = vector.shape_cast %154 : vector<8xf32> to vector<8x1xf32>
    %cst_39 = arith.constant 2.560000e+02 : f32
    %156 = vector.broadcast %cst_39 : f32 to vector<8x1xf32>
    %157 = arith.subf %156, %149 : vector<8x1xf32>
    %cst_40 = arith.constant 9.99999996E-13 : f32
    %158 = vector.broadcast %cst_40 : f32 to vector<8x1xf32>
    %159 = arith.addf %157, %158 : vector<8x1xf32>
    %cst_41 = arith.constant 9.99999996E-13 : f32
    %160 = vector.broadcast %cst_41 : f32 to vector<8x1xf32>
    %161 = arith.addf %149, %160 : vector<8x1xf32>
    %162 = arith.subf %10, %152 : vector<8x1xf32>
    %163 = arith.subf %12, %155 : vector<8x1xf32>
    %164 = tpu.reciprocal %159 : vector<8x1xf32> -> vector<8x1xf32>
    %165 = arith.mulf %162, %164 : vector<8x1xf32>
    %166 = arith.mulf %163, %164 : vector<8x1xf32>
    %167 = arith.mulf %165, %165 : vector<8x1xf32>
    %168 = arith.subf %166, %167 : vector<8x1xf32>
    %cst_42 = arith.constant 0.000000e+00 : f32
    %169 = vector.broadcast %cst_42 : f32 to vector<8x1xf32>
    %170 = arith.maximumf %168, %169 : vector<8x1xf32>
    %cst_43 = arith.constant 9.99999997E-7 : f32
    %171 = vector.broadcast %cst_43 : f32 to vector<8x1xf32>
    %172 = arith.addf %170, %171 : vector<8x1xf32>
    %cst_44 = arith.constant 3.906250e-03 : f32
    %173 = vector.broadcast %cst_44 : f32 to vector<8x1xf32>
    %174 = arith.mulf %159, %173 : vector<8x1xf32>
    %175 = math.log %174 : vector<8x1xf32>
    %176 = tpu.reciprocal %161 : vector<8x1xf32> -> vector<8x1xf32>
    %177 = arith.mulf %152, %176 : vector<8x1xf32>
    %178 = arith.mulf %155, %176 : vector<8x1xf32>
    %179 = arith.mulf %177, %177 : vector<8x1xf32>
    %180 = arith.subf %178, %179 : vector<8x1xf32>
    %cst_45 = arith.constant 0.000000e+00 : f32
    %181 = vector.broadcast %cst_45 : f32 to vector<8x1xf32>
    %182 = arith.maximumf %180, %181 : vector<8x1xf32>
    %cst_46 = arith.constant 9.99999997E-7 : f32
    %183 = vector.broadcast %cst_46 : f32 to vector<8x1xf32>
    %184 = arith.addf %182, %183 : vector<8x1xf32>
    %cst_47 = arith.constant 3.906250e-03 : f32
    %185 = vector.broadcast %cst_47 : f32 to vector<8x1xf32>
    %186 = arith.mulf %161, %185 : vector<8x1xf32>
    %187 = math.log %186 : vector<8x1xf32>
    %188 = tpu.reciprocal %172 : vector<8x1xf32> -> vector<8x1xf32>
    %189 = tpu.reciprocal %184 : vector<8x1xf32> -> vector<8x1xf32>
    %cst_48 = arith.constant -5.000000e-01 : f32
    %190 = vector.broadcast %cst_48 : f32 to vector<8x1xf32>
    %191 = arith.mulf %190, %188 : vector<8x1xf32>
    %cst_49 = arith.constant -5.000000e-01 : f32
    %192 = vector.broadcast %cst_49 : f32 to vector<8x1xf32>
    %193 = arith.mulf %192, %189 : vector<8x1xf32>
    %194 = arith.subf %187, %175 : vector<8x1xf32>
    %195 = math.log %184 : vector<8x1xf32>
    %196 = math.log %172 : vector<8x1xf32>
    %197 = arith.subf %195, %196 : vector<8x1xf32>
    %cst_50 = arith.constant 5.000000e-01 : f32
    %198 = vector.broadcast %cst_50 : f32 to vector<8x1xf32>
    %199 = arith.mulf %198, %197 : vector<8x1xf32>
    %200 = arith.subf %194, %199 : vector<8x1xf32>
    %201 = arith.subf %193, %191 : vector<8x1xf32>
    %202 = arith.mulf %193, %177 : vector<8x1xf32>
    %203 = arith.mulf %191, %165 : vector<8x1xf32>
    %204 = arith.subf %202, %203 : vector<8x1xf32>
    %cst_51 = arith.constant -2.000000e+00 : f32
    %205 = vector.broadcast %cst_51 : f32 to vector<8x1xf32>
    %206 = arith.mulf %205, %204 : vector<8x1xf32>
    %207 = arith.mulf %193, %177 : vector<8x1xf32>
    %208 = arith.mulf %207, %177 : vector<8x1xf32>
    %209 = arith.mulf %191, %165 : vector<8x1xf32>
    %210 = arith.mulf %209, %165 : vector<8x1xf32>
    %211 = arith.subf %208, %210 : vector<8x1xf32>
    %212 = arith.addf %211, %200 : vector<8x1xf32>
    %213 = vector.broadcast %201 : vector<8x1xf32> to vector<8x256xf32>
    %214 = arith.mulf %213, %8 : vector<8x256xf32>
    %215 = vector.broadcast %206 : vector<8x1xf32> to vector<8x256xf32>
    %216 = arith.mulf %215, %0 : vector<8x256xf32>
    %217 = arith.addf %214, %216 : vector<8x256xf32>
    %218 = vector.broadcast %212 : vector<8x1xf32> to vector<8x256xf32>
    %219 = arith.addf %217, %218 : vector<8x256xf32>
    %cst_52 = arith.constant 5.000000e-01 : f32
    %220 = vector.broadcast %cst_52 : f32 to vector<8x256xf32>
    %221 = arith.mulf %220, %219 : vector<8x256xf32>
    %222 = math.tanh %221 : vector<8x256xf32>
    %cst_53 = arith.constant 5.000000e-01 : f32
    %223 = vector.broadcast %cst_53 : f32 to vector<8x256xf32>
    %224 = arith.mulf %223, %222 : vector<8x256xf32>
    %cst_54 = arith.constant 5.000000e-01 : f32
    %225 = vector.broadcast %cst_54 : f32 to vector<8x256xf32>
    %226 = arith.addf %224, %225 : vector<8x256xf32>
    %cst_55 = arith.constant dense<0.000000e+00> : vector<8xf32>
    %227 = vector.multi_reduction <add>, %226, %cst_55 [1] : vector<8x256xf32> to vector<8xf32>
    %228 = vector.shape_cast %227 : vector<8xf32> to vector<8x1xf32>
    %229 = arith.mulf %226, %0 : vector<8x256xf32>
    %cst_56 = arith.constant dense<0.000000e+00> : vector<8xf32>
    %230 = vector.multi_reduction <add>, %229, %cst_56 [1] : vector<8x256xf32> to vector<8xf32>
    %231 = vector.shape_cast %230 : vector<8xf32> to vector<8x1xf32>
    %232 = arith.mulf %226, %8 : vector<8x256xf32>
    %cst_57 = arith.constant dense<0.000000e+00> : vector<8xf32>
    %233 = vector.multi_reduction <add>, %232, %cst_57 [1] : vector<8x256xf32> to vector<8xf32>
    %234 = vector.shape_cast %233 : vector<8xf32> to vector<8x1xf32>
    %cst_58 = arith.constant 2.560000e+02 : f32
    %235 = vector.broadcast %cst_58 : f32 to vector<8x1xf32>
    %236 = arith.subf %235, %228 : vector<8x1xf32>
    %cst_59 = arith.constant 9.99999996E-13 : f32
    %237 = vector.broadcast %cst_59 : f32 to vector<8x1xf32>
    %238 = arith.addf %236, %237 : vector<8x1xf32>
    %cst_60 = arith.constant 9.99999996E-13 : f32
    %239 = vector.broadcast %cst_60 : f32 to vector<8x1xf32>
    %240 = arith.addf %228, %239 : vector<8x1xf32>
    %241 = arith.subf %10, %231 : vector<8x1xf32>
    %242 = arith.subf %12, %234 : vector<8x1xf32>
    %243 = tpu.reciprocal %238 : vector<8x1xf32> -> vector<8x1xf32>
    %244 = arith.mulf %241, %243 : vector<8x1xf32>
    %245 = arith.mulf %242, %243 : vector<8x1xf32>
    %246 = arith.mulf %244, %244 : vector<8x1xf32>
    %247 = arith.subf %245, %246 : vector<8x1xf32>
    %cst_61 = arith.constant 0.000000e+00 : f32
    %248 = vector.broadcast %cst_61 : f32 to vector<8x1xf32>
    %249 = arith.maximumf %247, %248 : vector<8x1xf32>
    %cst_62 = arith.constant 9.99999997E-7 : f32
    %250 = vector.broadcast %cst_62 : f32 to vector<8x1xf32>
    %251 = arith.addf %249, %250 : vector<8x1xf32>
    %cst_63 = arith.constant 3.906250e-03 : f32
    %252 = vector.broadcast %cst_63 : f32 to vector<8x1xf32>
    %253 = arith.mulf %238, %252 : vector<8x1xf32>
    %254 = tpu.reciprocal %240 : vector<8x1xf32> -> vector<8x1xf32>
    %255 = arith.mulf %231, %254 : vector<8x1xf32>
    %256 = arith.mulf %234, %254 : vector<8x1xf32>
    %257 = arith.mulf %255, %255 : vector<8x1xf32>
    %258 = arith.subf %256, %257 : vector<8x1xf32>
    %cst_64 = arith.constant 0.000000e+00 : f32
    %259 = vector.broadcast %cst_64 : f32 to vector<8x1xf32>
    %260 = arith.maximumf %258, %259 : vector<8x1xf32>
    %cst_65 = arith.constant 9.99999997E-7 : f32
    %261 = vector.broadcast %cst_65 : f32 to vector<8x1xf32>
    %262 = arith.addf %260, %261 : vector<8x1xf32>
    %cst_66 = arith.constant 3.906250e-03 : f32
    %263 = vector.broadcast %cst_66 : f32 to vector<8x1xf32>
    %264 = arith.mulf %240, %263 : vector<8x1xf32>
    %265 = arith.mulf %251, %5 : vector<8x1xf32>
    %cst_67 = arith.constant 9.99999997E-7 : f32
    %266 = vector.broadcast %cst_67 : f32 to vector<8x1xf32>
    %267 = arith.addf %265, %266 : vector<8x1xf32>
    %268 = tpu.reciprocal %267 : vector<8x1xf32> -> vector<8x1xf32>
    %cst_68 = arith.constant -5.000000e-01 : f32
    %269 = vector.broadcast %cst_68 : f32 to vector<8x1xf32>
    %270 = arith.mulf %269, %268 : vector<8x1xf32>
    %cst_69 = arith.constant 6.28318548 : f32
    %271 = vector.broadcast %cst_69 : f32 to vector<8x1xf32>
    %272 = arith.mulf %271, %267 : vector<8x1xf32>
    %273 = math.rsqrt %272 : vector<8x1xf32>
    %274 = arith.mulf %253, %273 : vector<8x1xf32>
    %cst_70 = arith.constant -2.000000e+00 : f32
    %275 = vector.broadcast %cst_70 : f32 to vector<8x1xf32>
    %276 = arith.mulf %275, %270 : vector<8x1xf32>
    %277 = arith.mulf %276, %244 : vector<8x1xf32>
    %278 = arith.mulf %270, %244 : vector<8x1xf32>
    %279 = arith.mulf %278, %244 : vector<8x1xf32>
    %280 = vector.broadcast %270 : vector<8x1xf32> to vector<8x256xf32>
    %281 = arith.mulf %280, %8 : vector<8x256xf32>
    %282 = vector.broadcast %277 : vector<8x1xf32> to vector<8x256xf32>
    %283 = arith.mulf %282, %0 : vector<8x256xf32>
    %284 = arith.addf %281, %283 : vector<8x256xf32>
    %285 = vector.broadcast %279 : vector<8x1xf32> to vector<8x256xf32>
    %286 = arith.addf %284, %285 : vector<8x256xf32>
    %287 = math.exp %286 : vector<8x256xf32>
    %288 = vector.broadcast %274 : vector<8x1xf32> to vector<8x256xf32>
    %289 = arith.mulf %288, %287 : vector<8x256xf32>
    %290 = arith.mulf %262, %5 : vector<8x1xf32>
    %cst_71 = arith.constant 9.99999997E-7 : f32
    %291 = vector.broadcast %cst_71 : f32 to vector<8x1xf32>
    %292 = arith.addf %290, %291 : vector<8x1xf32>
    %293 = tpu.reciprocal %292 : vector<8x1xf32> -> vector<8x1xf32>
    %cst_72 = arith.constant -5.000000e-01 : f32
    %294 = vector.broadcast %cst_72 : f32 to vector<8x1xf32>
    %295 = arith.mulf %294, %293 : vector<8x1xf32>
    %cst_73 = arith.constant 6.28318548 : f32
    %296 = vector.broadcast %cst_73 : f32 to vector<8x1xf32>
    %297 = arith.mulf %296, %292 : vector<8x1xf32>
    %298 = math.rsqrt %297 : vector<8x1xf32>
    %299 = arith.mulf %264, %298 : vector<8x1xf32>
    %cst_74 = arith.constant -2.000000e+00 : f32
    %300 = vector.broadcast %cst_74 : f32 to vector<8x1xf32>
    %301 = arith.mulf %300, %295 : vector<8x1xf32>
    %302 = arith.mulf %301, %255 : vector<8x1xf32>
    %303 = arith.mulf %295, %255 : vector<8x1xf32>
    %304 = arith.mulf %303, %255 : vector<8x1xf32>
    %305 = vector.broadcast %295 : vector<8x1xf32> to vector<8x256xf32>
    %306 = arith.mulf %305, %8 : vector<8x256xf32>
    %307 = vector.broadcast %302 : vector<8x1xf32> to vector<8x256xf32>
    %308 = arith.mulf %307, %0 : vector<8x256xf32>
    %309 = arith.addf %306, %308 : vector<8x256xf32>
    %310 = vector.broadcast %304 : vector<8x1xf32> to vector<8x256xf32>
    %311 = arith.addf %309, %310 : vector<8x256xf32>
    %312 = math.exp %311 : vector<8x256xf32>
    %313 = vector.broadcast %299 : vector<8x1xf32> to vector<8x256xf32>
    %314 = arith.mulf %313, %312 : vector<8x256xf32>
    %315 = arith.addf %289, %314 : vector<8x256xf32>
    %316 = vector.broadcast %6 : vector<8x1xf32> to vector<8x256xf32>
    %317 = arith.mulf %315, %316 : vector<8x256xf32>
    %318 = vector.broadcast %7 : vector<8x1xf32> to vector<8x256xf32>
    %319 = arith.addf %318, %317 : vector<8x256xf32>
    %320 = tpu.reciprocal %319 : vector<8x256xf32> -> vector<8x256xf32>
    %321 = arith.mulf %0, %320 : vector<8x256xf32>
    %c0_75 = arith.constant 0 : index
    %c0_76 = arith.constant 0 : index
    %322 = vector.load %arg3[%c0_75, %c0_76] : memref<8x256xf32, #tpu.memory_space<vmem>>, vector<8x256xf32>
    tpu.vector_store %arg3[%c0_75, %c0_76], %321 {strides = array<i32>} : memref<8x256xf32, #tpu.memory_space<vmem>>, vector<8x256xf32>,
    return
  }
  func.func @transform_0(%arg0: i32) -> (i32, i32) {
    %c0_i32 = arith.constant 0 : i32
    %c0_i32_0 = arith.constant 0 : i32
    return %arg0, %c0_i32 : i32, i32
  }
  func.func @transform_1(%arg0: i32) -> (i32, i32) {
    %c0_i32 = arith.constant 0 : i32
    %c0_i32_0 = arith.constant 0 : i32
    %c0_i32_1 = arith.constant 0 : i32
    return %c0_i32, %c0_i32_0 : i32, i32
  }
  func.func @transform_2(%arg0: i32) -> (i32, i32) {
    %c0_i32 = arith.constant 0 : i32
    %c0_i32_0 = arith.constant 0 : i32
    return %arg0, %c0_i32 : i32, i32
  }
}

</mosaic_0001>

<llo_original>
// kernel: tpu_custom_call.1
$region0: #{tpu_custom_call.1}
  #allocation0 [shape = 'u32[]', space=smem, size = 0x4, offset = 0x4, fixed_abs, tag = 'smem constant byte address 0x4 - core index']
  #allocation1 [shape = 'u32[144,128]{1,0:T(1,128)}', space=vmem, size = 0x12000, scoped, tag = 'internal scratch']
  %s0 = inlined_call_operand.hbm [shape: f32[8,256], index: 0, kind: input, shape index: {}]
  %s1 = inlined_call_operand.vmem [shape: f32[8,3], index: 1, kind: input, shape index: {}]
  %s2 = inlined_call_operand.hbm [shape: f32[8,256], index: 2, kind: output, shape index: {}]
  %s3 = sld [smem:[#allocation0]]
  $region22: #{tpu_custom_call.1} parent=0
    _
  %s5 = ssub.s32 1, %s3
  %s6 = scalar_select 0, %s5, %s3
  $region1: #{tpu_custom_call.1} parent=0
    #allocation2 [shape = 'u8[8192]{0}', space=vmem, size = 0x2000, scoped, tag = 'input window, operand 0, single buffered']
    #allocation3 [shape = 's32[1]{0}', space=sflag, size = 0x4, scoped, tag = 'scoped memory for tpu_custom_call.1']
    #allocation4 [shape = 's32[1]{0}', space=sflag, size = 0x4, scoped, tag = 'scoped memory for tpu_custom_call.1']
    #allocation5 [shape = 'u8[8192]{0}', space=vmem, size = 0x2000, scoped, tag = 'output window, operand 0, single buffered']
    %7 = vsyncpa [#allocation3], 0
    %8 = vsyncpa [#allocation4], 0
    // Predicated region
    $region2: #{tpu_custom_call.1} parent=1 // pred_check
      _
    $region3: #{tpu_custom_call.1} parent=1 // pred_check_branch
      %10 = sbr.rel (0) target = $region5
    $region4: #{tpu_custom_call.1} parent=1 // pred_region
      %s12 = ssub.s32 256, 256
      %13 = vsyncadd [#allocation3], %s12
      %s15 = sshll.u32 [#allocation2], 4
      %s16 = int_to_ptr.vmem [resolvable:$true] %s15
      %18 = dma.hbm_to_vmem [thread:$0]  %s0, 256, %s16, [#allocation3]
    $region5: #{tpu_custom_call.1} parent=1 // pred_fallthru
      _
    // Predicated region
    $region6: #{tpu_custom_call.1} parent=1 // pred_check
      _
    $region7: #{tpu_custom_call.1} parent=1 // pred_check_branch
      %20 = sbr.rel (0) target = $region9
    $region8: #{tpu_custom_call.1} parent=1 // pred_region
      _
    $region9: #{tpu_custom_call.1} parent=1 // pred_fallthru
      _
    // Predicated region
    $region10: #{tpu_custom_call.1} parent=1 // pred_check
      _
    $region11: #{tpu_custom_call.1} parent=1 // pred_check_branch
      %22 = sbr.rel (0) target = $region13
    $region12: #{tpu_custom_call.1} parent=1 // pred_region
      %23 = dma.done [#allocation3], 256
    $region13: #{tpu_custom_call.1} parent=1 // pred_fallthru
      _
    %v24 = vld [vmem:[#allocation2] sm:$0xff]
    %v25 = vld [vmem:[#allocation2 + $0x8] sm:$0xff]
    %s26 = smul.u32 0, 8
    %s27 = scalar_lea.vmem %s1, %s26
    %v28 = vld [vmem:[%s27] sm:$0xff]
    %v29 = vmul.f32 %v24, %v24
    %v30 = vmul.f32 %v25, %v25
    %v31 = vadd.f32 %v24, %v25
    %32 = vadd.xlane.f32.xlu0 %v31
    %v33 = vpop.xlane.xlu0 %32
    %v34 = vadd.f32 %v29, %v30
    %35 = vadd.xlane.f32.xlu0 %v34
    %v36 = vpop.xlane.xlu0 %35
    %v37 = vmul.f32 %v33, 0.00390625
    %v38 = vmul.f32 %v36, 0.00390625
    %v39 = vmul.f32 %v37, %v37
    %v40 = vsub.f32 %v38, %v39
    %v41 = vmax.f32 %v40, 0.0
    %v42 = vadd.f32 %v41, 1e-06
    %v43 = vrsqrt.pop %v42
    %v44 = vmul.f32 %v42, %v43
    %vm45 = vcmp.eq.f32.partialorder %v42, inf
    %v46 = vsel %vm45, %v42, %v44
    %vm47 = vcmp.eq.f32.partialorder %v42, 0.0
    %v48 = vand.u32 %v42, 2147483648
    %v49 = vsel %vm47, %v48, %v46
    %v50 = vmul.f32 %v49, -0.5
    %v51 = vadd.f32 %v37, %v50
    %v52 = vmul.f32 %v49, 0.5
    %v53 = vadd.f32 %v37, %v52
    %v54 = vrcp.pop %v42
    %v55 = vmul.f32 %v54, -0.5
    %v56 = vlog2.pop %v42
    %v57 = vmul.f32 %v56, 0.6931472
    %v58 = vsub.f32 %v57, %v57
    %v59 = vmul.f32 %v58, 0.5
    %v60 = vsub.f32 0.0, %v59
    %v61 = vsub.f32 %v55, %v55
    %v62 = vmul.f32 %v55, %v53
    %v63 = vmul.f32 %v55, %v51
    %v64 = vsub.f32 %v62, %v63
    %v65 = vmul.f32 %v64, -2.0
    %v66 = vmul.f32 %v62, %v53
    %v67 = vmul.f32 %v63, %v51
    %v68 = vsub.f32 %v66, %v67
    %v69 = vadd.f32 %v68, %v60
    %v70 = vmul.f32 %v61, %v29
    %v71 = vmul.f32 %v61, %v30
    %v72 = vmul.f32 %v65, %v24
    %v73 = vmul.f32 %v65, %v25
    %v74 = vadd.f32 %v70, %v72
    %v75 = vadd.f32 %v71, %v73
    %v76 = vadd.f32 %v74, %v69
    %v77 = vadd.f32 %v75, %v69
    %v78 = vmul.f32 %v76, 0.5
    %v79 = vmul.f32 %v77, 0.5
    %v80 = vtanh.pop %v78
    %v81 = vtanh.pop %v79
    %v82 = vmul.f32 %v80, 0.5
    %v83 = vmul.f32 %v81, 0.5
    %v84 = vadd.f32 %v82, 0.5
    %v85 = vadd.f32 %v83, 0.5
    %v86 = vadd.f32 %v84, %v85
    %87 = vadd.xlane.f32.xlu0 %v86
    %v88 = vpop.xlane.xlu0 %87
    %v89 = vmul.f32 %v84, %v24
    %v90 = vmul.f32 %v85, %v25
    %v91 = vadd.f32 %v89, %v90
    %92 = vadd.xlane.f32.xlu0 %v91
    %v93 = vpop.xlane.xlu0 %92
    %v94 = vmul.f32 %v84, %v29
    %v95 = vmul.f32 %v85, %v30
    %v96 = vadd.f32 %v94, %v95
    %97 = vadd.xlane.f32.xlu0 %v96
    %v98 = vpop.xlane.xlu0 %97
    %v99 = vsub.f32 256.0, %v88
    %v100 = vadd.f32 %v99, 1e-12
    %v101 = vadd.f32 %v88, 1e-12
    %v102 = vsub.f32 %v33, %v93
    %v103 = vsub.f32 %v36, %v98
    %v104 = vrcp.pop %v100
    %v105 = vmul.f32 %v102, %v104
    %v106 = vmul.f32 %v103, %v104
    %v107 = vmul.f32 %v105, %v105
    %v108 = vsub.f32 %v106, %v107
    %v109 = vmax.f32 %v108, 0.0
    %v110 = vadd.f32 %v109, 1e-06
    %v111 = vmul.f32 %v100, 0.00390625
    %v112 = vlog2.pop %v111
    %v113 = vmul.f32 %v112, 0.6931472
    %v114 = vrcp.pop %v101
    %v115 = vmul.f32 %v93, %v114
    %v116 = vmul.f32 %v98, %v114
    %v117 = vmul.f32 %v115, %v115
    %v118 = vsub.f32 %v116, %v117
    %v119 = vmax.f32 %v118, 0.0
    %v120 = vadd.f32 %v119, 1e-06
    %v121 = vmul.f32 %v101, 0.00390625
    %v122 = vlog2.pop %v121
    %v123 = vmul.f32 %v122, 0.6931472
    %v124 = vrcp.pop %v110
    %v125 = vrcp.pop %v120
    %v126 = vmul.f32 %v124, -0.5
    %v127 = vmul.f32 %v125, -0.5
    %v128 = vsub.f32 %v123, %v113
    %v129 = vlog2.pop %v120
    %v130 = vmul.f32 %v129, 0.6931472
    %v131 = vlog2.pop %v110
    %v132 = vmul.f32 %v131, 0.6931472
    %v133 = vsub.f32 %v130, %v132
    %v134 = vmul.f32 %v133, 0.5
    %v135 = vsub.f32 %v128, %v134
    %v136 = vsub.f32 %v127, %v126
    %v137 = vmul.f32 %v127, %v115
    %v138 = vmul.f32 %v126, %v105
    %v139 = vsub.f32 %v137, %v138
    %v140 = vmul.f32 %v139, -2.0
    %v141 = vmul.f32 %v137, %v115
    %v142 = vmul.f32 %v138, %v105
    %v143 = vsub.f32 %v141, %v142
    %v144 = vadd.f32 %v143, %v135
    %v145 = vmul.f32 %v136, %v29
    %v146 = vmul.f32 %v136, %v30
    %v147 = vmul.f32 %v140, %v24
    %v148 = vmul.f32 %v140, %v25
    %v149 = vadd.f32 %v145, %v147
    %v150 = vadd.f32 %v146, %v148
    %v151 = vadd.f32 %v149, %v144
    %v152 = vadd.f32 %v150, %v144
    %v153 = vmul.f32 %v151, 0.5
    %v154 = vmul.f32 %v152, 0.5
    %v155 = vtanh.pop %v153
    %v156 = vtanh.pop %v154
    %v157 = vmul.f32 %v155, 0.5
    %v158 = vmul.f32 %v156, 0.5
    %v159 = vadd.f32 %v157, 0.5
    %v160 = vadd.f32 %v158, 0.5
    %v161 = vadd.f32 %v159, %v160
    %162 = vadd.xlane.f32.xlu0 %v161
    %v163 = vpop.xlane.xlu0 %162
    %v164 = vmul.f32 %v159, %v24
    %v165 = vmul.f32 %v160, %v25
    %v166 = vadd.f32 %v164, %v165
    %167 = vadd.xlane.f32.xlu0 %v166
    %v168 = vpop.xlane.xlu0 %167
    %v169 = vmul.f32 %v159, %v29
    %v170 = vmul.f32 %v160, %v30
    %v171 = vadd.f32 %v169, %v170
    %172 = vadd.xlane.f32.xlu0 %v171
    %v173 = vpop.xlane.xlu0 %172
    %v174 = vsub.f32 256.0, %v163
    %v175 = vadd.f32 %v174, 1e-12
    %v176 = vadd.f32 %v163, 1e-12
    %v177 = vsub.f32 %v33, %v168
    %v178 = vsub.f32 %v36, %v173
    %v179 = vrcp.pop %v175
    %v180 = vmul.f32 %v177, %v179
    %v181 = vmul.f32 %v178, %v179
    %v182 = vmul.f32 %v180, %v180
    %v183 = vsub.f32 %v181, %v182
    %v184 = vmax.f32 %v183, 0.0
    %v185 = vadd.f32 %v184, 1e-06
    %v186 = vmul.f32 %v175, 0.00390625
    %v187 = vlog2.pop %v186
    %v188 = vmul.f32 %v187, 0.6931472
    %v189 = vrcp.pop %v176
    %v190 = vmul.f32 %v168, %v189
    %v191 = vmul.f32 %v173, %v189
    %v192 = vmul.f32 %v190, %v190
    %v193 = vsub.f32 %v191, %v192
    %v194 = vmax.f32 %v193, 0.0
    %v195 = vadd.f32 %v194, 1e-06
    %v196 = vmul.f32 %v176, 0.00390625
    %v197 = vlog2.pop %v196
    %v198 = vmul.f32 %v197, 0.6931472
    %v199 = vrcp.pop %v185
    %v200 = vrcp.pop %v195
    %v201 = vmul.f32 %v199, -0.5
    %v202 = vmul.f32 %v200, -0.5
    %v203 = vsub.f32 %v198, %v188
    %v204 = vlog2.pop %v195
    %v205 = vmul.f32 %v204, 0.6931472
    %v206 = vlog2.pop %v185
    %v207 = vmul.f32 %v206, 0.6931472
    %v208 = vsub.f32 %v205, %v207
    %v209 = vmul.f32 %v208, 0.5
    %v210 = vsub.f32 %v203, %v209
    %v211 = vsub.f32 %v202, %v201
    %v212 = vmul.f32 %v202, %v190
    %v213 = vmul.f32 %v201, %v180
    %v214 = vsub.f32 %v212, %v213
    %v215 = vmul.f32 %v214, -2.0
    %v216 = vmul.f32 %v212, %v190
    %v217 = vmul.f32 %v213, %v180
    %v218 = vsub.f32 %v216, %v217
    %v219 = vadd.f32 %v218, %v210
    %v220 = vmul.f32 %v211, %v29
    %v221 = vmul.f32 %v211, %v30
    %v222 = vmul.f32 %v215, %v24
    %v223 = vmul.f32 %v215, %v25
    %v224 = vadd.f32 %v220, %v222
    %v225 = vadd.f32 %v221, %v223
    %v226 = vadd.f32 %v224, %v219
    %v227 = vadd.f32 %v225, %v219
    %v228 = vmul.f32 %v226, 0.5
    %v229 = vmul.f32 %v227, 0.5
    %v230 = vtanh.pop %v228
    %v231 = vtanh.pop %v229
    %v232 = vmul.f32 %v230, 0.5
    %v233 = vmul.f32 %v231, 0.5
    %v234 = vadd.f32 %v232, 0.5
    %v235 = vadd.f32 %v233, 0.5
    %v236 = vadd.f32 %v234, %v235
    %237 = vadd.xlane.f32.xlu0 %v236
    %v238 = vpop.xlane.xlu0 %237
    %v239 = vmul.f32 %v234, %v24
    %v240 = vmul.f32 %v235, %v25
    %v241 = vadd.f32 %v239, %v240
    %242 = vadd.xlane.f32.xlu0 %v241
    %v243 = vpop.xlane.xlu0 %242
    %v244 = vmul.f32 %v234, %v29
    %v245 = vmul.f32 %v235, %v30
    %v246 = vadd.f32 %v244, %v245
    %247 = vadd.xlane.f32.xlu0 %v246
    %v248 = vpop.xlane.xlu0 %247
    %v249 = vsub.f32 256.0, %v238
    %v250 = vadd.f32 %v249, 1e-12
    %v251 = vadd.f32 %v238, 1e-12
    %v252 = vsub.f32 %v33, %v243
    %v253 = vsub.f32 %v36, %v248
    %v254 = vrcp.pop %v250
    %v255 = vmul.f32 %v252, %v254
    %v256 = vmul.f32 %v253, %v254
    %v257 = vmul.f32 %v255, %v255
    %v258 = vsub.f32 %v256, %v257
    %v259 = vmax.f32 %v258, 0.0
    %v260 = vadd.f32 %v259, 1e-06
    %v261 = vmul.f32 %v250, 0.00390625
    %v262 = vrcp.pop %v251
    %v263 = vmul.f32 %v243, %v262
    %v264 = vmul.f32 %v248, %v262
    %v265 = vmul.f32 %v263, %v263
    %v266 = vsub.f32 %v264, %v265
    %v267 = vmax.f32 %v266, 0.0
    %v268 = vadd.f32 %v267, 1e-06
    %v269 = vmul.f32 %v251, 0.00390625
    %v270 = vmul.f32 %v260, %v28
    %v271 = vadd.f32 %v270, 1e-06
    %v272 = vrcp.pop %v271
    %v273 = vmul.f32 %v272, -0.5
    %v274 = vmul.f32 %v271, 6.2831855
    %v275 = vrsqrt.pop %v274
    %v276 = vmul.f32 %v261, %v275
    %v277 = vmul.f32 %v273, -2.0
    %v278 = vmul.f32 %v277, %v255
    %v279 = vmul.f32 %v273, %v255
    %v280 = vmul.f32 %v279, %v255
    %282 = vset.pattern.permute.xlu0 0
    %283 = vperm.xlu0 %282, %v273
    %v284 = vpop.permute.xlu0 %283
    %v286 = vmul.f32 %v284, %v29
    %v287 = vmul.f32 %v284, %v30
    %289 = vset.pattern.permute.xlu0 0
    %290 = vperm.xlu0 %289, %v278
    %v291 = vpop.permute.xlu0 %290
    %v293 = vmul.f32 %v291, %v24
    %v294 = vmul.f32 %v291, %v25
    %v295 = vadd.f32 %v286, %v293
    %v296 = vadd.f32 %v287, %v294
    %298 = vset.pattern.permute.xlu0 0
    %299 = vperm.xlu0 %298, %v280
    %v300 = vpop.permute.xlu0 %299
    %v302 = vadd.f32 %v295, %v300
    %v303 = vadd.f32 %v296, %v300
    %v304 = vmul.f32 %v302, 1.442695
    %v305 = vpow.pop %v304
    %v306 = vmul.f32 %v303, 1.442695
    %v307 = vpow.pop %v306
    %309 = vset.pattern.permute.xlu0 0
    %310 = vperm.xlu0 %309, %v276
    %v311 = vpop.permute.xlu0 %310
    %v313 = vmul.f32 %v311, %v305
    %v314 = vmul.f32 %v311, %v307
    %v315 = vmul.f32 %v268, %v28
    %v316 = vadd.f32 %v315, 1e-06
    %v317 = vrcp.pop %v316
    %v318 = vmul.f32 %v317, -0.5
    %v319 = vmul.f32 %v316, 6.2831855
    %v320 = vrsqrt.pop %v319
    %v321 = vmul.f32 %v269, %v320
    %v322 = vmul.f32 %v318, -2.0
    %v323 = vmul.f32 %v322, %v263
    %v324 = vmul.f32 %v318, %v263
    %v325 = vmul.f32 %v324, %v263
    %327 = vset.pattern.permute.xlu0 0
    %328 = vperm.xlu0 %327, %v318
    %v329 = vpop.permute.xlu0 %328
    %v331 = vmul.f32 %v329, %v29
    %v332 = vmul.f32 %v329, %v30
    %334 = vset.pattern.permute.xlu0 0
    %335 = vperm.xlu0 %334, %v323
    %v336 = vpop.permute.xlu0 %335
    %v338 = vmul.f32 %v336, %v24
    %v339 = vmul.f32 %v336, %v25
    %v340 = vadd.f32 %v331, %v338
    %v341 = vadd.f32 %v332, %v339
    %343 = vset.pattern.permute.xlu0 0
    %344 = vperm.xlu0 %343, %v325
    %v345 = vpop.permute.xlu0 %344
    %v347 = vadd.f32 %v340, %v345
    %v348 = vadd.f32 %v341, %v345
    %v349 = vmul.f32 %v347, 1.442695
    %v350 = vpow.pop %v349
    %v351 = vmul.f32 %v348, 1.442695
    %v352 = vpow.pop %v351
    %354 = vset.pattern.permute.xlu0 0
    %355 = vperm.xlu0 %354, %v321
    %v356 = vpop.permute.xlu0 %355
    %v358 = vmul.f32 %v356, %v350
    %v359 = vmul.f32 %v356, %v352
    %v360 = vadd.f32 %v313, %v358
    %v361 = vadd.f32 %v314, %v359
    %363 = vset.pattern.permute.xlu0 1
    %364 = vperm.xlu0 %363, %v28
    %v365 = vpop.permute.xlu0 %364
    %v367 = vmul.f32 %v360, %v365
    %v368 = vmul.f32 %v361, %v365
    %369 = vset.pattern.permute.xlu0 2
    %370 = vperm.xlu0 %369, %v28
    %v371 = vpop.permute.xlu0 %370
    %v373 = vadd.f32 %v371, %v367
    %v374 = vadd.f32 %v371, %v368
    %v375 = vrcp.pop %v373
    %v376 = vrcp.pop %v374
    %v377 = vmul.f32 %v24, %v375
    %v378 = vmul.f32 %v25, %v376
    %379 = vst [vmem:[#allocation5] sm:$0xff] %v377
    %380 = vst [vmem:[#allocation5 + $0x8] sm:$0xff] %v378
    // Predicated region
    $region14: #{tpu_custom_call.1} parent=1 // pred_check
      _
    $region15: #{tpu_custom_call.1} parent=1 // pred_check_branch
      %382 = sbr.rel (0) target = $region17
    $region16: #{tpu_custom_call.1} parent=1 // pred_region
      %s384 = ssub.s32 256, 256
      %385 = vsyncadd [#allocation4], %s384
      %s387 = sshll.u32 [#allocation5], 4
      %s388 = int_to_ptr.vmem [resolvable:$true] %s387
      %390 = dma.vmem_to_hbm [thread:$0]  %s388, 256, %s2, [#allocation4]
    $region17: #{tpu_custom_call.1} parent=1 // pred_fallthru
      _
    // Predicated region
    $region18: #{tpu_custom_call.1} parent=1 // pred_check
      _
    $region19: #{tpu_custom_call.1} parent=1 // pred_check_branch
      %392 = sbr.rel (0) target = $region21
    $region20: #{tpu_custom_call.1} parent=1 // pred_region
      %393 = dma.done [#allocation4], 256
    $region21: #{tpu_custom_call.1} parent=1 // pred_fallthru
      _
    %394 = vsyncpa [#allocation3], 1
    %395 = vsyncpa [#allocation4], 1

</llo_original>
